<compile_context>
chip_gen: v5e
topology: v5e:2x2
jax: 0.10.0
libtpu: 0.0.40
codegen_flags: <defaults>
</compile_context>

<pallas_src>
import functools

import jax
import jax.numpy as jnp
from jax.experimental import pallas as pl
from jax.experimental.pallas import tpu as pltpu

LOSS_TAU = 100.0  # args.loss_tau default


def _contrastive_kernel(x_ref, anchors_ref, r_col_ref, r_row_ref, out_ref, *, tau, n):
    """x_ref: (N, D) UNSORTED output1.  anchors_ref: (2, D) = [output2; output3].
    r_col_ref: (N, 1) ranking, r_row_ref: (1, N) ranking.  out_ref: SMEM (1,)."""
    eps = 1e-8
    neg_big = jnp.float32(-1e30)

    # In-kernel upcast (inputs may be bf16 / f32; cast after the DMA).
    x = x_ref[...].astype(jnp.float32)            # (N, D)
    a = anchors_ref[...].astype(jnp.float32)      # (2, D)
    r_col = r_col_ref[...].astype(jnp.float32)    # (N, 1)  ranking[i] on sublanes
    r_row = r_row_ref[...].astype(jnp.float32)    # (1, N)  ranking[j] on lanes

    # ---- descending-sort position of every row (stable tie-break by index) ----
    # pos[i] = #{j : r[j] > r[i]}  +  #{j < i : r[j] == r[i]}
    # == position of row i under argsort(ranking, descending=True).
    ii = jax.lax.broadcasted_iota(jnp.int32, (n, n), 0)   # data index i (sublanes)
    jj = jax.lax.broadcasted_iota(jnp.int32, (n, n), 1)   # index j / loss column k (lanes)
    before = (r_row > r_col) | ((r_row == r_col) & (jj < ii))
    pos = jnp.sum(jnp.where(before, 1.0, 0.0), axis=1, keepdims=True)   # (N, 1) f32

    # ---- cosine similarities vs. both anchors (lane reduction over D) ----
    # TODO(synk): for D >= ~512 replace the two VPU broadcast-mul + lane reduces
    # with one MXU dot: lax.dot_general(x, a, contracting D, preferred f32).
    a2 = a[0:1, :]
    a3 = a[1:2, :]
    xn = jnp.sqrt(jnp.sum(x * x, axis=-1, keepdims=True))        # (N, 1)
    o2n = jnp.sqrt(jnp.sum(a2 * a2, axis=-1, keepdims=True))     # (1, 1)
    o3n = jnp.sqrt(jnp.sum(a3 * a3, axis=-1, keepdims=True))     # (1, 1)
    # Exact divide on purpose (not pl.reciprocal(approx=True)): tau scales the
    # cosines by 100, so approx-reciprocal error would exceed the 1e-4 match.
    c2 = tau * jnp.sum(x * a2, axis=-1, keepdims=True) / jnp.maximum(xn * o2n, eps)  # (N, 1)
    c3 = tau * jnp.sum(x * a3, axis=-1, keepdims=True) / jnp.maximum(xn * o3n, eps)  # (N, 1)

    # With sc2[k] = c2[i where pos[i]==k] (sorted similarities), the loss is
    #   sum_{k=0..N-2} [ -sc2[k] + logsumexp(sc2[k:])   ]
    # + sum_{m=1..N-1} [ -sc3[m] + logsumexp(sc3[:m+1]) ]   all / (2*(N-1)).
    # Expressed directly on the UNSORTED c2/c3 through pos -> no (N, D) gather.
    # TODO(synk): O(N^2) masked logsumexp; switch to O(N) prefix/suffix
    # cumulative logsumexp (lane-axis layout) if N grows past a few hundred.
    kf = jj.astype(jnp.float32)                   # loss column index as f32

    mask1 = pos >= kf                             # rows belonging to suffix sc2[k:]
    v1 = jnp.where(mask1, jnp.broadcast_to(c2, (n, n)), neg_big)
    m1 = jnp.max(v1, axis=0, keepdims=True)                                   # (1, N)
    lse1 = m1 + jnp.log(jnp.sum(jnp.exp(v1 - m1), axis=0, keepdims=True))     # (1, N)

    mask2 = pos <= kf                             # rows belonging to prefix sc3[:m+1]
    v2 = jnp.where(mask2, jnp.broadcast_to(c3, (n, n)), neg_big)
    m2 = jnp.max(v2, axis=0, keepdims=True)
    lse2 = m2 + jnp.log(jnp.sum(jnp.exp(v2 - m2), axis=0, keepdims=True))     # (1, N)

    col = jax.lax.broadcasted_iota(jnp.int32, (1, n), 1)
    sum_lse1 = jnp.sum(jnp.where(col < n - 1, lse1, 0.0))   # k = 0 .. N-2
    sum_c2p = jnp.sum(jnp.where(pos < n - 1, c2, 0.0))      # sum_k sc2[k], k <= N-2
    sum_lse2 = jnp.sum(jnp.where(col >= 1, lse2, 0.0))      # m = 1 .. N-1
    sum_c3p = jnp.sum(jnp.where(pos >= 1, c3, 0.0))         # sum_m sc3[m], m >= 1

    total = (sum_lse1 - sum_c2p + sum_lse2 - sum_c3p) * jnp.float32(1.0 / (2.0 * (n - 1)))
    out_ref[0] = total


def contrastive_loss_pallas(output1, output2, output3, ranking, tau=LOSS_TAU):
    x = jnp.squeeze(output1, axis=1)              # (N, D), caller's dtype (no upcast here)
    n, d = x.shape
    if n < 2:
        raise ValueError(f"ContrastiveLoss needs at least 2 ranked samples, got n={n}")

    anchors = jnp.concatenate([output2.reshape(1, d), output3.reshape(1, d)], axis=0)  # (2, D)
    r_col = ranking.reshape(n, 1)
    r_row = ranking.reshape(1, n)

    kernel = functools.partial(_contrastive_kernel, tau=float(tau), n=int(n))
    out = pl.pallas_call(
        kernel,
        out_shape=jax.ShapeDtypeStruct((1,), jnp.float32),
        # Gridless call: whole arrays resident in VMEM, no double-buffering.
        # TODO(synk): for very large N*D add a grid over D ("arbitrary") with an
        # f32 VMEM accumulator so tiles fit v7x's 64 MiB VMEM and pipelining returns.
        in_specs=[
            pl.BlockSpec(memory_space=pltpu.MemorySpace.VMEM),  # x (N, D)
            pl.BlockSpec(memory_space=pltpu.MemorySpace.VMEM),  # anchors (2, D)
            pl.BlockSpec(memory_space=pltpu.MemorySpace.VMEM),  # ranking (N, 1)
            pl.BlockSpec(memory_space=pltpu.MemorySpace.VMEM),  # ranking (1, N)
        ],
        out_specs=pl.BlockSpec(memory_space=pltpu.MemorySpace.SMEM),
    )(x, anchors, r_col, r_row)
    return out[0]


def contrastive_loss_ref(output1, output2, output3, ranking, tau=LOSS_TAU):
    """Pure-JAX reference mirroring the PyTorch loop."""
    x = jnp.squeeze(output1, axis=1)
    order = jnp.argsort(-ranking)
    x = jnp.take(x, order, axis=0)
    n = x.shape[0]

    def cos(a, b):
        num = jnp.sum(a * b, axis=-1)
        den = jnp.maximum(
            jnp.linalg.norm(a, axis=-1) * jnp.linalg.norm(b, axis=-1), 1e-8
        )
        return num / den

    c2 = tau * cos(x, output2)   # (N,)
    c3 = tau * cos(x, output3)   # (N,)

    losses = []
    for p in range(1, n):
        k = n - p - 1
        m = n - p
        l1 = -c2[k] + jax.scipy.special.logsumexp(c2[k:])
        l2 = -c3[m] + jax.scipy.special.logsumexp(c3[: m + 1])
        losses.append(l1)
        losses.append(l2)
    return jnp.mean(jnp.stack(losses))


if __name__ == "__main__":
    N, D = 4, 32   # batch_size=4 (default args), feature dim 32
    key = jax.random.PRNGKey(0)
    k1, k2, k3, k4 = jax.random.split(key, 4)
    output1 = jax.random.normal(k1, (N, 1, D), dtype=jnp.float32)
    output2 = jax.random.normal(k2, (1, D), dtype=jnp.float32)
    output3 = jax.random.normal(k3, (1, D), dtype=jnp.float32)
    ranking = jax.random.uniform(k4, (N,), dtype=jnp.float32)

    loss = contrastive_loss_pallas(output1, output2, output3, ranking)
    loss = jax.block_until_ready(loss)

    ref = contrastive_loss_ref(output1, output2, output3, ranking)
    ref = jax.block_until_ready(ref)

    assert jnp.allclose(loss, ref, rtol=1e-4, atol=1e-4), (loss, ref)
    print("KERNEL_OK")
</pallas_src>

<mosaic_0001>
module attributes {stable_mosaic.version = 11 : i64} {
  func.func @_contrastive_kernel(%arg0: memref<4x32xf32, #tpu.memory_space<vmem>>, %arg1: memref<2x32xf32, #tpu.memory_space<vmem>>, %arg2: memref<4x1xf32, #tpu.memory_space<vmem>>, %arg3: memref<1x4xf32, #tpu.memory_space<vmem>>, %arg4: memref<1xf32, #tpu.memory_space<smem>>) attributes {dimension_semantics = [], scalar_prefetch = 0 : i64, scratch_operands = 0 : i64, tpu.core_type = #tpu.core_type<tc>} {
    %c0 = arith.constant 0 : index
    %c0_0 = arith.constant 0 : index
    %0 = vector.load %arg0[%c0, %c0_0] : memref<4x32xf32, #tpu.memory_space<vmem>>, vector<4x32xf32>
    %c0_1 = arith.constant 0 : index
    %c0_2 = arith.constant 0 : index
    %1 = vector.load %arg1[%c0_1, %c0_2] : memref<2x32xf32, #tpu.memory_space<vmem>>, vector<2x32xf32>
    %c0_3 = arith.constant 0 : index
    %c0_4 = arith.constant 0 : index
    %2 = vector.load %arg2[%c0_3, %c0_4] : memref<4x1xf32, #tpu.memory_space<vmem>>, vector<4x1xf32>
    %c0_5 = arith.constant 0 : index
    %c0_6 = arith.constant 0 : index
    %3 = vector.load %arg3[%c0_5, %c0_6] : memref<1x4xf32, #tpu.memory_space<vmem>>, vector<1x4xf32>
    %4 = tpu.iota {dimensions = array<i32: 0>} : vector<4x4xi32>
    %5 = tpu.iota {dimensions = array<i32: 1>} : vector<4x4xi32>
    %6 = vector.broadcast %3 : vector<1x4xf32> to vector<4x4xf32>
    %7 = vector.broadcast %2 : vector<4x1xf32> to vector<4x4xf32>
    %8 = arith.cmpf ogt, %6, %7 : vector<4x4xf32>
    %9 = vector.broadcast %3 : vector<1x4xf32> to vector<4x4xf32>
    %10 = vector.broadcast %2 : vector<4x1xf32> to vector<4x4xf32>
    %11 = arith.cmpf oeq, %9, %10 : vector<4x4xf32>
    %12 = arith.cmpi slt, %5, %4 : vector<4x4xi32>
    %13 = arith.andi %11, %12 : vector<4x4xi1>
    %14 = arith.ori %8, %13 : vector<4x4xi1>
    %cst = arith.constant 1.000000e+00 : f32
    %cst_7 = arith.constant 0.000000e+00 : f32
    %15 = vector.broadcast %cst : f32 to vector<4x4xf32>
    %16 = vector.broadcast %cst_7 : f32 to vector<4x4xf32>
    %17 = arith.select %14, %15, %16 : vector<4x4xi1>, vector<4x4xf32>
    %cst_8 = arith.constant dense<0.000000e+00> : vector<4xf32>
    %18 = vector.multi_reduction <add>, %17, %cst_8 [1] : vector<4x4xf32> to vector<4xf32>
    %19 = vector.shape_cast %18 : vector<4xf32> to vector<4x1xf32>
    %20 = vector.extract_strided_slice %1 {offsets = [0, 0], sizes = [1, 32], strides = [1, 1]} : vector<2x32xf32> to vector<1x32xf32>
    %21 = vector.extract_strided_slice %1 {offsets = [1, 0], sizes = [1, 32], strides = [1, 1]} : vector<2x32xf32> to vector<1x32xf32>
    %22 = arith.mulf %0, %0 : vector<4x32xf32>
    %cst_9 = arith.constant dense<0.000000e+00> : vector<4xf32>
    %23 = vector.multi_reduction <add>, %22, %cst_9 [1] : vector<4x32xf32> to vector<4xf32>
    %24 = vector.shape_cast %23 : vector<4xf32> to vector<4x1xf32>
    %25 = math.sqrt %24 : vector<4x1xf32>
    %26 = arith.mulf %20, %20 : vector<1x32xf32>
    %cst_10 = arith.constant dense<0.000000e+00> : vector<1xf32>
    %27 = vector.multi_reduction <add>, %26, %cst_10 [1] : vector<1x32xf32> to vector<1xf32>
    %28 = vector.shape_cast %27 : vector<1xf32> to vector<1x1xf32>
    %29 = math.sqrt %28 : vector<1x1xf32>
    %30 = arith.mulf %21, %21 : vector<1x32xf32>
    %cst_11 = arith.constant dense<0.000000e+00> : vector<1xf32>
    %31 = vector.multi_reduction <add>, %30, %cst_11 [1] : vector<1x32xf32> to vector<1xf32>
    %32 = vector.shape_cast %31 : vector<1xf32> to vector<1x1xf32>
    %33 = math.sqrt %32 : vector<1x1xf32>
    %34 = vector.broadcast %20 : vector<1x32xf32> to vector<4x32xf32>
    %35 = arith.mulf %0, %34 : vector<4x32xf32>
    %cst_12 = arith.constant dense<0.000000e+00> : vector<4xf32>
    %36 = vector.multi_reduction <add>, %35, %cst_12 [1] : vector<4x32xf32> to vector<4xf32>
    %37 = vector.shape_cast %36 : vector<4xf32> to vector<4x1xf32>
    %cst_13 = arith.constant 1.000000e+02 : f32
    %38 = vector.broadcast %cst_13 : f32 to vector<4x1xf32>
    %39 = arith.mulf %38, %37 : vector<4x1xf32>
    %40 = vector.broadcast %29 : vector<1x1xf32> to vector<4x1xf32>
    %41 = arith.mulf %25, %40 : vector<4x1xf32>
    %cst_14 = arith.constant 9.99999993E-9 : f32
    %42 = vector.broadcast %cst_14 : f32 to vector<4x1xf32>
    %43 = arith.maximumf %41, %42 : vector<4x1xf32>
    %44 = arith.divf %39, %43 : vector<4x1xf32>
    %45 = vector.broadcast %21 : vector<1x32xf32> to vector<4x32xf32>
    %46 = arith.mulf %0, %45 : vector<4x32xf32>
    %cst_15 = arith.constant dense<0.000000e+00> : vector<4xf32>
    %47 = vector.multi_reduction <add>, %46, %cst_15 [1] : vector<4x32xf32> to vector<4xf32>
    %48 = vector.shape_cast %47 : vector<4xf32> to vector<4x1xf32>
    %cst_16 = arith.constant 1.000000e+02 : f32
    %49 = vector.broadcast %cst_16 : f32 to vector<4x1xf32>
    %50 = arith.mulf %49, %48 : vector<4x1xf32>
    %51 = vector.broadcast %33 : vector<1x1xf32> to vector<4x1xf32>
    %52 = arith.mulf %25, %51 : vector<4x1xf32>
    %cst_17 = arith.constant 9.99999993E-9 : f32
    %53 = vector.broadcast %cst_17 : f32 to vector<4x1xf32>
    %54 = arith.maximumf %52, %53 : vector<4x1xf32>
    %55 = arith.divf %50, %54 : vector<4x1xf32>
    %56 = arith.sitofp %5 : vector<4x4xi32> to vector<4x4xf32>
    %57 = vector.broadcast %19 : vector<4x1xf32> to vector<4x4xf32>
    %58 = arith.cmpf oge, %57, %56 : vector<4x4xf32>
    %59 = vector.shape_cast %44 : vector<4x1xf32> to vector<4x1xf32>
    %60 = vector.broadcast %59 : vector<4x1xf32> to vector<4x4xf32>
    %cst_18 = arith.constant -1.000000e+30 : f32
    %61 = vector.broadcast %cst_18 : f32 to vector<4x4xf32>
    %62 = arith.select %58, %60, %61 : vector<4x4xi1>, vector<4x4xf32>
    %cst_19 = arith.constant dense<0xFF800000> : vector<4xf32>
    %63 = vector.multi_reduction <maximumf>, %62, %cst_19 [0] : vector<4x4xf32> to vector<4xf32>
    %64 = vector.shape_cast %63 : vector<4xf32> to vector<1x4xf32>
    %65 = vector.broadcast %64 : vector<1x4xf32> to vector<4x4xf32>
    %66 = arith.subf %62, %65 : vector<4x4xf32>
    %67 = math.exp %66 : vector<4x4xf32>
    %cst_20 = arith.constant dense<0.000000e+00> : vector<4xf32>
    %68 = vector.multi_reduction <add>, %67, %cst_20 [0] : vector<4x4xf32> to vector<4xf32>
    %69 = vector.shape_cast %68 : vector<4xf32> to vector<1x4xf32>
    %70 = math.log %69 : vector<1x4xf32>
    %71 = arith.addf %64, %70 : vector<1x4xf32>
    %72 = vector.broadcast %19 : vector<4x1xf32> to vector<4x4xf32>
    %73 = arith.cmpf ole, %72, %56 : vector<4x4xf32>
    %74 = vector.shape_cast %55 : vector<4x1xf32> to vector<4x1xf32>
    %75 = vector.broadcast %74 : vector<4x1xf32> to vector<4x4xf32>
    %cst_21 = arith.constant -1.000000e+30 : f32
    %76 = vector.broadcast %cst_21 : f32 to vector<4x4xf32>
    %77 = arith.select %73, %75, %76 : vector<4x4xi1>, vector<4x4xf32>
    %cst_22 = arith.constant dense<0xFF800000> : vector<4xf32>
    %78 = vector.multi_reduction <maximumf>, %77, %cst_22 [0] : vector<4x4xf32> to vector<4xf32>
    %79 = vector.shape_cast %78 : vector<4xf32> to vector<1x4xf32>
    %80 = vector.broadcast %79 : vector<1x4xf32> to vector<4x4xf32>
    %81 = arith.subf %77, %80 : vector<4x4xf32>
    %82 = math.exp %81 : vector<4x4xf32>
    %cst_23 = arith.constant dense<0.000000e+00> : vector<4xf32>
    %83 = vector.multi_reduction <add>, %82, %cst_23 [0] : vector<4x4xf32> to vector<4xf32>
    %84 = vector.shape_cast %83 : vector<4xf32> to vector<1x4xf32>
    %85 = math.log %84 : vector<1x4xf32>
    %86 = arith.addf %79, %85 : vector<1x4xf32>
    %87 = tpu.iota {dimensions = array<i32: 1>} : vector<1x4xi32>
    %c3_i32 = arith.constant 3 : i32
    %88 = vector.broadcast %c3_i32 : i32 to vector<1x4xi32>
    %89 = arith.cmpi slt, %87, %88 : vector<1x4xi32>
    %cst_24 = arith.constant 0.000000e+00 : f32
    %90 = vector.broadcast %cst_24 : f32 to vector<1x4xf32>
    %91 = arith.select %89, %71, %90 : vector<1x4xi1>, vector<1x4xf32>
    %92 = vector.shape_cast %91 : vector<1x4xf32> to vector<1x1x4xf32>
    %cst_25 = arith.constant dense<0.000000e+00> : vector<1xf32>
    %93 = vector.multi_reduction <add>, %92, %cst_25 [1, 2] : vector<1x1x4xf32> to vector<1xf32>
    %94 = vector.shape_cast %93 : vector<1xf32> to vector<1x1x1xf32>
    %95 = vector.extract %94[0, 0, 0] : f32 from vector<1x1x1xf32>
    %cst_26 = arith.constant 3.000000e+00 : f32
    %96 = vector.broadcast %cst_26 : f32 to vector<4x1xf32>
    %97 = arith.cmpf olt, %19, %96 : vector<4x1xf32>
    %cst_27 = arith.constant 0.000000e+00 : f32
    %98 = vector.broadcast %cst_27 : f32 to vector<4x1xf32>
    %99 = arith.select %97, %44, %98 : vector<4x1xi1>, vector<4x1xf32>
    %100 = vector.shape_cast %99 : vector<4x1xf32> to vector<1x4x1xf32>
    %cst_28 = arith.constant dense<0.000000e+00> : vector<1xf32>
    %101 = vector.multi_reduction <add>, %100, %cst_28 [1, 2] : vector<1x4x1xf32> to vector<1xf32>
    %102 = vector.shape_cast %101 : vector<1xf32> to vector<1x1x1xf32>
    %103 = vector.extract %102[0, 0, 0] : f32 from vector<1x1x1xf32>
    %c1_i32 = arith.constant 1 : i32
    %104 = vector.broadcast %c1_i32 : i32 to vector<1x4xi32>
    %105 = arith.cmpi sge, %87, %104 : vector<1x4xi32>
    %cst_29 = arith.constant 0.000000e+00 : f32
    %106 = vector.broadcast %cst_29 : f32 to vector<1x4xf32>
    %107 = arith.select %105, %86, %106 : vector<1x4xi1>, vector<1x4xf32>
    %108 = vector.shape_cast %107 : vector<1x4xf32> to vector<1x1x4xf32>
    %cst_30 = arith.constant dense<0.000000e+00> : vector<1xf32>
    %109 = vector.multi_reduction <add>, %108, %cst_30 [1, 2] : vector<1x1x4xf32> to vector<1xf32>
    %110 = vector.shape_cast %109 : vector<1xf32> to vector<1x1x1xf32>
    %111 = vector.extract %110[0, 0, 0] : f32 from vector<1x1x1xf32>
    %cst_31 = arith.constant 1.000000e+00 : f32
    %112 = vector.broadcast %cst_31 : f32 to vector<4x1xf32>
    %113 = arith.cmpf oge, %19, %112 : vector<4x1xf32>
    %cst_32 = arith.constant 0.000000e+00 : f32
    %114 = vector.broadcast %cst_32 : f32 to vector<4x1xf32>
    %115 = arith.select %113, %55, %114 : vector<4x1xi1>, vector<4x1xf32>
    %116 = vector.shape_cast %115 : vector<4x1xf32> to vector<1x4x1xf32>
    %cst_33 = arith.constant dense<0.000000e+00> : vector<1xf32>
    %117 = vector.multi_reduction <add>, %116, %cst_33 [1, 2] : vector<1x4x1xf32> to vector<1xf32>
    %118 = vector.shape_cast %117 : vector<1xf32> to vector<1x1x1xf32>
    %119 = vector.extract %118[0, 0, 0] : f32 from vector<1x1x1xf32>
    %120 = arith.subf %95, %103 : f32
    %121 = arith.addf %120, %111 : f32
    %122 = arith.subf %121, %119 : f32
    %cst_34 = arith.constant 0.166666672 : f32
    %123 = arith.mulf %122, %cst_34 : f32
    %c0_35 = arith.constant 0 : index
    %124 = memref.load %arg4[%c0_35] : memref<1xf32, #tpu.memory_space<smem>>
    memref.store %123, %arg4[%c0_35] : memref<1xf32, #tpu.memory_space<smem>>
    return
  }
}

</mosaic_0001>

<llo_original>
// kernel: tpu_custom_call.1
$region0: #{tpu_custom_call.1}
  #allocation0 [shape = 'u32[]', space=smem, size = 0x4, offset = 0x4, fixed_abs, tag = 'smem constant byte address 0x4 - core index']
  #allocation1 [shape = 'u32[72,128]{1,0:T(1,128)}', space=vmem, size = 0x9000, scoped, tag = 'internal scratch']
  %s0 = inlined_call_operand.vmem [shape: f32[4,32], index: 0, kind: input, shape index: {}]
  %s1 = inlined_call_operand.hbm [shape: f32[2,32], index: 1, kind: input, shape index: {}]
  %s2 = inlined_call_operand.vmem [shape: f32[4,1], index: 2, kind: input, shape index: {}]
  %s3 = inlined_call_operand.vmem [shape: f32[1,4], index: 3, kind: input, shape index: {}]
  %s4 = inlined_call_operand.hbm [shape: f32[1], index: 4, kind: output, shape index: {}]
  %s5 = sld [smem:[#allocation0]]
  $region30: #{tpu_custom_call.1} parent=0
    _
  %s7 = ssub.s32 1, %s5
  %s8 = scalar_select 0, %s7, %s5
  $region1: #{tpu_custom_call.1} parent=0
    #allocation2 [shape = 'u8[1024]{0}', space=vmem, size = 0x400, scoped, tag = 'input window, operand 1, single buffered']
    #allocation3 [shape = 's32[1]{0}', space=sflag, size = 0x4, scoped, tag = 'scoped memory for tpu_custom_call.1']
    #allocation4 [shape = 's32[1]{0}', space=sflag, size = 0x4, scoped, tag = 'scoped memory for tpu_custom_call.1']
    #allocation5 [shape = 'u8[512]{0}', space=smem, size = 0x200, scoped, tag = 'output window, operand 0, single buffered']
    %9 = vsyncpa [#allocation3], 0
    %10 = vsyncpa [#allocation4], 0
    // Predicated region
    $region2: #{tpu_custom_call.1} parent=1 // pred_check
      _
    $region3: #{tpu_custom_call.1} parent=1 // pred_check_branch
      %12 = sbr.rel (0) target = $region5
    $region4: #{tpu_custom_call.1} parent=1 // pred_region
      _
    $region5: #{tpu_custom_call.1} parent=1 // pred_fallthru
      _
    // Predicated region
    $region6: #{tpu_custom_call.1} parent=1 // pred_check
      _
    $region7: #{tpu_custom_call.1} parent=1 // pred_check_branch
      %14 = sbr.rel (0) target = $region9
    $region8: #{tpu_custom_call.1} parent=1 // pred_region
      %16 = vsyncadd [#allocation3], 0
      %s18 = sshll.u32 %s1, 4
      %s19 = int_to_ptr.hbm [resolvable:$true] %s18
      %s20 = sshll.u32 [#allocation2], 4
      %s21 = int_to_ptr.vmem [resolvable:$true] %s20
      %23 = dma.hbm_to_vmem [thread:$0]  %s19, 32, %s21, [#allocation3]
    $region9: #{tpu_custom_call.1} parent=1 // pred_fallthru
      _
    // Predicated region
    $region10: #{tpu_custom_call.1} parent=1 // pred_check
      _
    $region11: #{tpu_custom_call.1} parent=1 // pred_check_branch
      %25 = sbr.rel (0) target = $region13
    $region12: #{tpu_custom_call.1} parent=1 // pred_region
      _
    $region13: #{tpu_custom_call.1} parent=1 // pred_fallthru
      _
    // Predicated region
    $region14: #{tpu_custom_call.1} parent=1 // pred_check
      _
    $region15: #{tpu_custom_call.1} parent=1 // pred_check_branch
      %27 = sbr.rel (0) target = $region17
    $region16: #{tpu_custom_call.1} parent=1 // pred_region
      _
    $region17: #{tpu_custom_call.1} parent=1 // pred_fallthru
      _
    // Predicated region
    $region18: #{tpu_custom_call.1} parent=1 // pred_check
      _
    $region19: #{tpu_custom_call.1} parent=1 // pred_check_branch
      %29 = sbr.rel (0) target = $region21
    $region20: #{tpu_custom_call.1} parent=1 // pred_region
      %31 = dma.done [#allocation3], 32
    $region21: #{tpu_custom_call.1} parent=1 // pred_fallthru
      _
    %v32 = vld [vmem:[%s0] sm:$0xf]
    %v33 = vld [vmem:[#allocation2] sm:$0x3]
    %v34 = vld [vmem:[%s2] sm:$0xf]
    %v35 = vld [vmem:[%s3] sm:$0x1]
    %v36 = vlaneseq
    %v37 = vshrl.u32 %v36, 7
    %v38 = vlaneseq
    %v39 = vand.u32 %v38, 127
    %v41 = vperm.slane %v35, 0
    %44 = vset.pattern.permute.xlu0 0
    %45 = vperm.xlu0 %44, %v34
    %v46 = vpop.permute.xlu0 %45
    %vm48 = vcmp.gt.f32.partialorder %v41, %v46
    %vm49 = vcmp.eq.f32.partialorder %v41, %v46
    %vm50 = vcmp.lt.s32.totalorder %v39, %v37
    %vm51 = vmand %vm49, %vm50
    %vm52 = vmor %vm48, %vm51
    %v53 = vsel %vm52, 1.0, 0.0
    %vm54 = vcmask 27648
    %v55 = vsel %vm54, %v53, 0.0
    %56 = vadd.xlane.f32.xlu0 %v55
    %v57 = vpop.xlane.xlu0 %56
    %v58 = vmul.f32 %v32, %v32
    %vm59 = vcmask 257024
    %v60 = vsel %vm59, %v58, 0.0
    %61 = vadd.xlane.f32.xlu0 %v60
    %v62 = vpop.xlane.xlu0 %61
    %v63 = vrsqrt.pop %v62
    %v64 = vmul.f32 %v63, %v62
    %v65 = vmul.f32 %v64, %v63
    %v66 = vmul.f32 0.5, %v65
    %v67 = vsub.f32 1.5, %v66
    %v68 = vmul.f32 %v63, %v67
    %v69 = vmul.f32 %v62, %v68
    %vm70 = vcmp.eq.f32.partialorder %v62, inf
    %v71 = vsel %vm70, %v62, %v69
    %vm72 = vcmp.eq.f32.partialorder %v62, 0.0
    %v73 = vand.u32 %v62, 2147483648
    %v74 = vsel %vm72, %v73, %v71
    %v75 = vmul.f32 %v33, %v33
    %vm76 = vcmask 253952
    %v77 = vsel %vm76, %v75, 0.0
    %78 = vadd.xlane.f32.xlu0 %v77
    %v79 = vpop.xlane.xlu0 %78
    %v80 = vrsqrt.pop %v79
    %v81 = vmul.f32 %v80, %v79
    %v82 = vmul.f32 %v81, %v80
    %v83 = vmul.f32 0.5, %v82
    %v84 = vsub.f32 1.5, %v83
    %v85 = vmul.f32 %v80, %v84
    %v86 = vmul.f32 %v79, %v85
    %vm87 = vcmp.eq.f32.partialorder %v79, inf
    %v88 = vsel %vm87, %v79, %v86
    %vm89 = vcmp.eq.f32.partialorder %v79, 0.0
    %v90 = vand.u32 %v79, 2147483648
    %v91 = vsel %vm89, %v90, %v88
    %vm92 = vcmask 254977
    %v93 = vsel %vm92, %v75, 0.0
    %94 = vadd.xlane.f32.xlu0 %v93
    %v95 = vpop.xlane.xlu0 %94
    %v96 = vrsqrt.pop %v95
    %v97 = vmul.f32 %v96, %v95
    %v98 = vmul.f32 %v97, %v96
    %v99 = vmul.f32 0.5, %v98
    %v100 = vsub.f32 1.5, %v99
    %v101 = vmul.f32 %v96, %v100
    %v102 = vmul.f32 %v95, %v101
    %vm103 = vcmp.eq.f32.partialorder %v95, inf
    %v104 = vsel %vm103, %v95, %v102
    %vm105 = vcmp.eq.f32.partialorder %v95, 0.0
    %v106 = vand.u32 %v95, 2147483648
    %v107 = vsel %vm105, %v106, %v104
    %v108 = vperm.slane %v33, 0
    %v109 = vmul.f32 %v32, %v108
    %v110 = vsel %vm59, %v109, 0.0
    %111 = vadd.xlane.f32.xlu0 %v110
    %v112 = vpop.xlane.xlu0 %111
    %v113 = vmul.f32 %v112, 100.0
    %v114 = vperm.slane %v91, 0
    %v115 = vmul.f32 %v74, %v114
    %v116 = vmax.f32 %v115, 1e-08
    %v117 = vrcp.pop %v116
    %v118 = vmul.f32 %v116, %v117
    %v119 = vsub.f32 1.0, %v118
    %v120 = vmul.f32 %v117, %v119
    %v121 = vadd.f32 %v117, %v120
    %vm122 = vweird.f32 %v116
    %vm123 = vweird.f32 %v117
    %vm124 = vmor %vm122, %vm123
    %v125 = vsel %vm124, %v117, %v121
    %v126 = vand.u32 2147483647, %v116
    %vm127 = vcmp.eq.f32.partialorder %v126, 8.507059e+37
    %v128 = vand.u32 %v116, 2147483648
    %v129 = vor.u32 1.1754944e-38, %v128
    %v130 = vsel %vm127, %v129, %v125
    %v131 = vmul.f32 %v113, %v130
    %v132 = vperm.slane %v33, 1
    %v133 = vmul.f32 %v32, %v132
    %v134 = vsel %vm59, %v133, 0.0
    %135 = vadd.xlane.f32.xlu0 %v134
    %v136 = vpop.xlane.xlu0 %135
    %v137 = vmul.f32 %v136, 100.0
    %v138 = vperm.slane %v107, 1
    %v139 = vmul.f32 %v74, %v138
    %v140 = vmax.f32 %v139, 1e-08
    %v141 = vrcp.pop %v140
    %v142 = vmul.f32 %v140, %v141
    %v143 = vsub.f32 1.0, %v142
    %v144 = vmul.f32 %v141, %v143
    %v145 = vadd.f32 %v141, %v144
    %vm146 = vweird.f32 %v140
    %vm147 = vweird.f32 %v141
    %vm148 = vmor %vm146, %vm147
    %v149 = vsel %vm148, %v141, %v145
    %v150 = vand.u32 2147483647, %v140
    %vm151 = vcmp.eq.f32.partialorder %v150, 8.507059e+37
    %v152 = vand.u32 %v140, 2147483648
    %v153 = vor.u32 1.1754944e-38, %v152
    %v154 = vsel %vm151, %v153, %v149
    %v155 = vmul.f32 %v137, %v154
    %v156 = vcvt.s32.f32 %v39
    %vm157 = vcmp.ge.f32.partialorder %v57, %v156
    %v158 = vsel %vm157, %v131, -1e+30
    %v159 = vsel %vm54, %v158, -inf
    %v160 = vrot.slane %v159, 4
    %v161 = vmax.f32 %v159, %v160
    %v162 = vrot.slane %v161, 2
    %v163 = vmax.f32 %v161, %v162
    %v164 = vrot.slane %v163, 1
    %v165 = vmax.f32 %v163, %v164
    %v166 = vsub.f32 %v158, %v165
    %v167 = vmul.f32 %v166, 1.442695
    %v168 = vpow.pop %v167
    %v169 = vsel %vm54, %v168, 0.0
    %v170 = vrot.slane %v169, 4
    %v171 = vadd.f32 %v169, %v170
    %v172 = vrot.slane %v171, 2
    %v173 = vadd.f32 %v171, %v172
    %v174 = vrot.slane %v173, 1
    %v175 = vadd.f32 %v173, %v174
    %v176 = vlog2.pop %v175
    %v177 = vmul.f32 %v176, 0.6931472
    %v178 = vadd.f32 %v165, %v177
    %vm179 = vcmp.le.f32.partialorder %v57, %v156
    %v180 = vsel %vm179, %v155, -1e+30
    %v181 = vsel %vm54, %v180, -inf
    %v182 = vrot.slane %v181, 4
    %v183 = vmax.f32 %v181, %v182
    %v184 = vrot.slane %v183, 2
    %v185 = vmax.f32 %v183, %v184
    %v186 = vrot.slane %v185, 1
    %v187 = vmax.f32 %v185, %v186
    %v188 = vsub.f32 %v180, %v187
    %v189 = vmul.f32 %v188, 1.442695
    %v190 = vpow.pop %v189
    %v191 = vsel %vm54, %v190, 0.0
    %v192 = vrot.slane %v191, 4
    %v193 = vadd.f32 %v191, %v192
    %v194 = vrot.slane %v193, 2
    %v195 = vadd.f32 %v193, %v194
    %v196 = vrot.slane %v195, 1
    %v197 = vadd.f32 %v195, %v196
    %v198 = vlog2.pop %v197
    %v199 = vmul.f32 %v198, 0.6931472
    %v200 = vadd.f32 %v187, %v199
    %vm201 = vcmp.lt.s32.totalorder %v39, 3
    %v202 = vsel %vm201, %v178, 0.0
    %vm203 = vcmask 24576
    %v204 = vsel %vm203, %v202, 0.0
    %205 = vadd.xlane.f32.xlu0 %v204
    %v206 = vpop.xlane.xlu0 %205
    %v207 = vrot.slane %v206, 4
    %v208 = vadd.f32 %v206, %v207
    %v209 = vrot.slane %v208, 2
    %v210 = vadd.f32 %v208, %v209
    %v211 = vrot.slane %v210, 1
    %v212 = vadd.f32 %v210, %v211
    %s213 = vtos %v212
    %vm214 = vcmp.lt.f32.partialorder %v57, 3.0
    %v215 = vsel %vm214, %v131, 0.0
    %vm216 = vcmask 3072
    %v217 = vsel %vm216, %v215, 0.0
    %218 = vadd.xlane.f32.xlu0 %v217
    %v219 = vpop.xlane.xlu0 %218
    %v220 = vrot.slane %v219, 4
    %v221 = vadd.f32 %v219, %v220
    %v222 = vrot.slane %v221, 2
    %v223 = vadd.f32 %v221, %v222
    %v224 = vrot.slane %v223, 1
    %v225 = vadd.f32 %v223, %v224
    %s226 = vtos %v225
    %vm227 = vcmp.ge.s32.totalorder %v39, 1
    %v228 = vsel %vm227, %v200, 0.0
    %v229 = vsel %vm203, %v228, 0.0
    %230 = vadd.xlane.f32.xlu0 %v229
    %v231 = vpop.xlane.xlu0 %230
    %v232 = vrot.slane %v231, 4
    %v233 = vadd.f32 %v231, %v232
    %v234 = vrot.slane %v233, 2
    %v235 = vadd.f32 %v233, %v234
    %v236 = vrot.slane %v235, 1
    %v237 = vadd.f32 %v235, %v236
    %s238 = vtos %v237
    %vm239 = vcmp.ge.f32.partialorder %v57, 1.0
    %v240 = vsel %vm239, %v155, 0.0
    %v241 = vsel %vm216, %v240, 0.0
    %242 = vadd.xlane.f32.xlu0 %v241
    %v243 = vpop.xlane.xlu0 %242
    %v244 = vrot.slane %v243, 4
    %v245 = vadd.f32 %v243, %v244
    %v246 = vrot.slane %v245, 2
    %v247 = vadd.f32 %v245, %v246
    %v248 = vrot.slane %v247, 1
    %v249 = vadd.f32 %v247, %v248
    %s250 = vtos %v249
    %s251 = ssub.f32 %s213, %s226
    %s252 = sadd.f32 %s251, %s238
    %s253 = ssub.f32 %s252, %s250
    %s254 = smul.f32 %s253, 0.16666667
    %s255 = scalar_lea.smem [#allocation5], 0
    %256 = sst [smem:[%s255]] %s254
    // Predicated region
    $region22: #{tpu_custom_call.1} parent=1 // pred_check
      _
    $region23: #{tpu_custom_call.1} parent=1 // pred_check_branch
      %258 = sbr.rel (0) target = $region25
    $region24: #{tpu_custom_call.1} parent=1 // pred_region
      %260 = vsyncadd [#allocation4], 0
      %s262 = sshll.u32 %s4, 4
      %s263 = int_to_ptr.hbm [resolvable:$true] %s262
      %265 = dma.smem_to_hbm [#allocation5], 16, %s263, [#allocation4]
    $region25: #{tpu_custom_call.1} parent=1 // pred_fallthru
      _
    // Predicated region
    $region26: #{tpu_custom_call.1} parent=1 // pred_check
      _
    $region27: #{tpu_custom_call.1} parent=1 // pred_check_branch
      %267 = sbr.rel (0) target = $region29
    $region28: #{tpu_custom_call.1} parent=1 // pred_region
      %269 = dma.done [#allocation4], 16
    $region29: #{tpu_custom_call.1} parent=1 // pred_fallthru
      _
    %270 = sfence
    %271 = vsyncpa [#allocation3], 1
    %272 = vsyncpa [#allocation4], 1

</llo_original>
